<compile_context>
chip_gen: v6e
topology: v6e:2x2x1
jax: 0.10.0
libtpu: 0.0.40
codegen_flags: <defaults>
</compile_context>

<pallas_src>
import functools

import jax
import jax.numpy as jnp
from jax.experimental import pallas as pl
from jax.experimental.pallas import tpu as pltpu


# ----------------------------- kernel helpers ------------------------------

def _softplus(x):
    # Matches torch.nn.Softplus (beta=1, threshold=20): linear above threshold.
    return jnp.where(x > 20.0, x, jnp.log1p(jnp.exp(jnp.minimum(x, 20.0))))


# --------------------------------- kernel ----------------------------------

def mc_dropout_dnn_kernel(x_ref,                 # (D_in, TB)
                          w1_ref, b1_ref, m1_ref,  # (H1, D_in), (H1, 1), (H1, TB)
                          w2_ref, b2_ref, m2_ref,  # (H2, H1),  (H2, 1), (H2, TB)
                          w3_ref, b3_ref,          # (2, H2),   (2, 1)
                          o_ref,                   # (2, TB): row0=loc, row1=scale
                          *, var_scale):
    x = x_ref[...]

    # --- layer 1: Linear -> Softplus -> Dropout (mask pre-scaled by 1/(1-p)) ---
    h1 = jnp.dot(w1_ref[...], x, preferred_element_type=jnp.float32) + b1_ref[...]
    h1 = _softplus(h1) * m1_ref[...]

    # --- layer 2: Linear -> Softplus -> Dropout ---
    h2 = jnp.dot(w2_ref[...], h1, preferred_element_type=jnp.float32) + b2_ref[...]
    h2 = _softplus(h2) * m2_ref[...]

    # --- layer 3: Linear -> Normal(loc, scale) params ---
    out = jnp.dot(w3_ref[...], h2, preferred_element_type=jnp.float32) + b3_ref[...]

    # Row 0 keeps loc; row 1 becomes (softplus(raw) + 1e-6) * var_scale.
    row = jax.lax.broadcasted_iota(jnp.int32, out.shape, 0)
    scale = (_softplus(out) + 1e-6) * var_scale
    o_ref[...] = jnp.where(row == 0, out, scale)


# --------------------------------- wrapper ---------------------------------

def prob_mc_dropout_dnn_forward(x, params, rng_key, *, dropout_p=0.005,
                                var_scale=1.0, block_batch=128):
    """Returns (loc, scale) of the Normal distribution, each shape (B,)."""
    w1, b1, w2, b2, w3, b3 = params          # weights (out, in), biases (out, 1)
    B, d_in = x.shape
    h1_dim = w1.shape[0]
    h2_dim = w2.shape[0]

    TB = block_batch
    b_pad = pl.cdiv(B, TB) * TB
    n_tiles = b_pad // TB

    # Transpose so batch is the lane (last) axis; zero-pad batch to a multiple
    # of the tile width.
    xt = jnp.zeros((d_in, b_pad), jnp.float32).at[:, :B].set(
        x.astype(jnp.float32).T)

    # MC-dropout masks, pre-scaled by 1/(1-p).  Drawn per call -> each forward
    # pass is a fresh stochastic sample, every batch element gets its own mask.
    keep = 1.0 - dropout_p
    k1, k2 = jax.random.split(rng_key)
    m1 = jax.random.bernoulli(k1, keep, (h1_dim, b_pad)).astype(jnp.float32) * (1.0 / keep)
    m2 = jax.random.bernoulli(k2, keep, (h2_dim, b_pad)).astype(jnp.float32) * (1.0 / keep)

    kernel = functools.partial(mc_dropout_dnn_kernel, var_scale=var_scale)

    def full_spec(a):
        return pl.BlockSpec(a.shape, lambda i: (0, 0))

    out = pl.pallas_call(
        kernel,
        out_shape=jax.ShapeDtypeStruct((2, b_pad), jnp.float32),
        grid=(n_tiles,),
        in_specs=[
            pl.BlockSpec((d_in, TB), lambda i: (0, i)),     # x tile
            full_spec(w1), full_spec(b1),
            pl.BlockSpec((h1_dim, TB), lambda i: (0, i)),   # dropout mask 1 tile
            full_spec(w2), full_spec(b2),
            pl.BlockSpec((h2_dim, TB), lambda i: (0, i)),   # dropout mask 2 tile
            full_spec(w3), full_spec(b3),
        ],
        out_specs=pl.BlockSpec((2, TB), lambda i: (0, i)),
        compiler_params=pltpu.CompilerParams(
            dimension_semantics=("parallel",)),
    )(xt, w1, b1, m1, w2, b2, m2, w3, b3)

    # Mirror torch's .squeeze(): (B,) loc and scale.
    loc = out[0, :B]
    scale = out[1, :B]
    return loc, scale


def init_params(key, input_size, hidden_size_1=50, hidden_size_2=20):
    """Deterministic init mimicking nn.Linear's U(-1/sqrt(fan_in), 1/sqrt(fan_in)).

    Weights are stored (out_features, in_features) like PyTorch, biases (out, 1).
    """
    ks = jax.random.split(key, 6)

    def lin(kw, kb, fan_in, fan_out):
        bound = 1.0 / (fan_in ** 0.5)
        w = jax.random.uniform(kw, (fan_out, fan_in), jnp.float32, -bound, bound)
        b = jax.random.uniform(kb, (fan_out, 1), jnp.float32, -bound, bound)
        return w, b

    w1, b1 = lin(ks[0], ks[1], input_size, hidden_size_1)
    w2, b2 = lin(ks[2], ks[3], hidden_size_1, hidden_size_2)
    w3, b3 = lin(ks[4], ks[5], hidden_size_2, 2)
    return (w1, b1, w2, b2, w3, b3)


if __name__ == "__main__":
    key = jax.random.PRNGKey(0)
    k_param, k_x, k_drop = jax.random.split(key, 3)

    batch = 16
    input_size = 8

    params = init_params(k_param, input_size)
    x = jax.random.normal(k_x, (batch, input_size), jnp.float32)

    loc, scale = prob_mc_dropout_dnn_forward(
        x, params, k_drop, dropout_p=0.005, var_scale=1.0)
    jax.block_until_ready((loc, scale))

    assert loc.shape == (batch,) and scale.shape == (batch,)
    assert bool(jnp.all(scale > 0.0))
    assert bool(jnp.all(jnp.isfinite(loc))) and bool(jnp.all(jnp.isfinite(scale)))
    print("KERNEL_OK")
</pallas_src>

<mosaic_0001>
module attributes {stable_mosaic.version = 11 : i64} {
  func.func @mc_dropout_dnn_kernel(%arg0: i32, %arg1: memref<8x128xf32, #tpu.memory_space<vmem>>, %arg2: memref<50x8xf32, #tpu.memory_space<vmem>>, %arg3: memref<50x1xf32, #tpu.memory_space<vmem>>, %arg4: memref<50x128xf32, #tpu.memory_space<vmem>>, %arg5: memref<20x50xf32, #tpu.memory_space<vmem>>, %arg6: memref<20x1xf32, #tpu.memory_space<vmem>>, %arg7: memref<20x128xf32, #tpu.memory_space<vmem>>, %arg8: memref<2x20xf32, #tpu.memory_space<vmem>>, %arg9: memref<2x1xf32, #tpu.memory_space<vmem>>, %arg10: memref<2x128xf32, #tpu.memory_space<vmem>>) attributes {dimension_semantics = [#tpu.dimension_semantics<parallel>], iteration_bounds = array<i64: 1>, scalar_prefetch = 0 : i64, scratch_operands = 0 : i64, tpu.core_type = #tpu.core_type<tc>, window_params = [{transform_indices = @transform_0, window_bounds = array<i64: 8, 128>}, {pipeline_mode = #tpu.pipeline_mode<synchronous>, transform_indices = @transform_1, window_bounds = array<i64: 50, 8>}, {pipeline_mode = #tpu.pipeline_mode<synchronous>, transform_indices = @transform_2, window_bounds = array<i64: 50, 1>}, {transform_indices = @transform_3, window_bounds = array<i64: 50, 128>}, {pipeline_mode = #tpu.pipeline_mode<synchronous>, transform_indices = @transform_4, window_bounds = array<i64: 20, 50>}, {pipeline_mode = #tpu.pipeline_mode<synchronous>, transform_indices = @transform_5, window_bounds = array<i64: 20, 1>}, {transform_indices = @transform_6, window_bounds = array<i64: 20, 128>}, {pipeline_mode = #tpu.pipeline_mode<synchronous>, transform_indices = @transform_7, window_bounds = array<i64: 2, 20>}, {pipeline_mode = #tpu.pipeline_mode<synchronous>, transform_indices = @transform_8, window_bounds = array<i64: 2, 1>}, {transform_indices = @transform_9, window_bounds = array<i64: 2, 128>}]} {
    %c0 = arith.constant 0 : index
    %c0_0 = arith.constant 0 : index
    %0 = vector.load %arg1[%c0, %c0_0] : memref<8x128xf32, #tpu.memory_space<vmem>>, vector<8x128xf32>
    %c0_1 = arith.constant 0 : index
    %c0_2 = arith.constant 0 : index
    %1 = vector.load %arg2[%c0_1, %c0_2] : memref<50x8xf32, #tpu.memory_space<vmem>>, vector<50x8xf32>
    %cst = arith.constant dense<0.000000e+00> : vector<50x128xf32>
    %2 = tpu.matmul %1, %0, %cst {dimension_numbers = #tpu.dot_dimension_numbers<[1], [0], [0], [1], [0, 0, 1, 1], [], []>} : vector<50x8xf32>, vector<8x128xf32>, vector<50x128xf32> -> vector<50x128xf32>
    %c0_3 = arith.constant 0 : index
    %c0_4 = arith.constant 0 : index
    %3 = vector.load %arg3[%c0_3, %c0_4] : memref<50x1xf32, #tpu.memory_space<vmem>>, vector<50x1xf32>
    %4 = vector.broadcast %3 : vector<50x1xf32> to vector<50x128xf32>
    %5 = arith.addf %2, %4 : vector<50x128xf32>
    %cst_5 = arith.constant 2.000000e+01 : f32
    %6 = vector.broadcast %cst_5 : f32 to vector<50x128xf32>
    %7 = arith.cmpf ogt, %5, %6 : vector<50x128xf32>
    %cst_6 = arith.constant 2.000000e+01 : f32
    %8 = vector.broadcast %cst_6 : f32 to vector<50x128xf32>
    %9 = arith.minimumf %5, %8 : vector<50x128xf32>
    %10 = math.exp %9 : vector<50x128xf32>
    %11 = math.log1p %10 : vector<50x128xf32>
    %12 = arith.select %7, %5, %11 : vector<50x128xi1>, vector<50x128xf32>
    %c0_7 = arith.constant 0 : index
    %c0_8 = arith.constant 0 : index
    %13 = vector.load %arg4[%c0_7, %c0_8] : memref<50x128xf32, #tpu.memory_space<vmem>>, vector<50x128xf32>
    %14 = arith.mulf %12, %13 : vector<50x128xf32>
    %c0_9 = arith.constant 0 : index
    %c0_10 = arith.constant 0 : index
    %15 = vector.load %arg5[%c0_9, %c0_10] : memref<20x50xf32, #tpu.memory_space<vmem>>, vector<20x50xf32>
    %cst_11 = arith.constant dense<0.000000e+00> : vector<20x128xf32>
    %16 = tpu.matmul %15, %14, %cst_11 {dimension_numbers = #tpu.dot_dimension_numbers<[1], [0], [0], [1], [0, 0, 1, 1], [], []>} : vector<20x50xf32>, vector<50x128xf32>, vector<20x128xf32> -> vector<20x128xf32>
    %c0_12 = arith.constant 0 : index
    %c0_13 = arith.constant 0 : index
    %17 = vector.load %arg6[%c0_12, %c0_13] : memref<20x1xf32, #tpu.memory_space<vmem>>, vector<20x1xf32>
    %18 = vector.broadcast %17 : vector<20x1xf32> to vector<20x128xf32>
    %19 = arith.addf %16, %18 : vector<20x128xf32>
    %cst_14 = arith.constant 2.000000e+01 : f32
    %20 = vector.broadcast %cst_14 : f32 to vector<20x128xf32>
    %21 = arith.cmpf ogt, %19, %20 : vector<20x128xf32>
    %cst_15 = arith.constant 2.000000e+01 : f32
    %22 = vector.broadcast %cst_15 : f32 to vector<20x128xf32>
    %23 = arith.minimumf %19, %22 : vector<20x128xf32>
    %24 = math.exp %23 : vector<20x128xf32>
    %25 = math.log1p %24 : vector<20x128xf32>
    %26 = arith.select %21, %19, %25 : vector<20x128xi1>, vector<20x128xf32>
    %c0_16 = arith.constant 0 : index
    %c0_17 = arith.constant 0 : index
    %27 = vector.load %arg7[%c0_16, %c0_17] : memref<20x128xf32, #tpu.memory_space<vmem>>, vector<20x128xf32>
    %28 = arith.mulf %26, %27 : vector<20x128xf32>
    %c0_18 = arith.constant 0 : index
    %c0_19 = arith.constant 0 : index
    %29 = vector.load %arg8[%c0_18, %c0_19] : memref<2x20xf32, #tpu.memory_space<vmem>>, vector<2x20xf32>
    %cst_20 = arith.constant dense<0.000000e+00> : vector<2x128xf32>
    %30 = tpu.matmul %29, %28, %cst_20 {dimension_numbers = #tpu.dot_dimension_numbers<[1], [0], [0], [1], [0, 0, 1, 1], [], []>} : vector<2x20xf32>, vector<20x128xf32>, vector<2x128xf32> -> vector<2x128xf32>
    %c0_21 = arith.constant 0 : index
    %c0_22 = arith.constant 0 : index
    %31 = vector.load %arg9[%c0_21, %c0_22] : memref<2x1xf32, #tpu.memory_space<vmem>>, vector<2x1xf32>
    %32 = vector.broadcast %31 : vector<2x1xf32> to vector<2x128xf32>
    %33 = arith.addf %30, %32 : vector<2x128xf32>
    %34 = tpu.iota {dimensions = array<i32: 0>} : vector<2x128xi32>
    %cst_23 = arith.constant 2.000000e+01 : f32
    %35 = vector.broadcast %cst_23 : f32 to vector<2x128xf32>
    %36 = arith.cmpf ogt, %33, %35 : vector<2x128xf32>
    %cst_24 = arith.constant 2.000000e+01 : f32
    %37 = vector.broadcast %cst_24 : f32 to vector<2x128xf32>
    %38 = arith.minimumf %33, %37 : vector<2x128xf32>
    %39 = math.exp %38 : vector<2x128xf32>
    %40 = math.log1p %39 : vector<2x128xf32>
    %41 = arith.select %36, %33, %40 : vector<2x128xi1>, vector<2x128xf32>
    %cst_25 = arith.constant 9.99999997E-7 : f32
    %42 = vector.broadcast %cst_25 : f32 to vector<2x128xf32>
    %43 = arith.addf %41, %42 : vector<2x128xf32>
    %cst_26 = arith.constant 1.000000e+00 : f32
    %44 = vector.broadcast %cst_26 : f32 to vector<2x128xf32>
    %45 = arith.mulf %43, %44 : vector<2x128xf32>
    %c0_i32 = arith.constant 0 : i32
    %46 = vector.broadcast %c0_i32 : i32 to vector<2x128xi32>
    %47 = arith.cmpi eq, %34, %46 : vector<2x128xi32>
    %48 = arith.select %47, %33, %45 : vector<2x128xi1>, vector<2x128xf32>
    %c0_27 = arith.constant 0 : index
    %c0_28 = arith.constant 0 : index
    %49 = vector.load %arg10[%c0_27, %c0_28] : memref<2x128xf32, #tpu.memory_space<vmem>>, vector<2x128xf32>
    tpu.vector_store %arg10[%c0_27, %c0_28], %48 {strides = array<i32>} : memref<2x128xf32, #tpu.memory_space<vmem>>, vector<2x128xf32>,
    return
  }
  func.func @transform_0(%arg0: i32) -> (i32, i32) {
    %c0_i32 = arith.constant 0 : i32
    %c0_i32_0 = arith.constant 0 : i32
    return %c0_i32, %arg0 : i32, i32
  }
  func.func @transform_1(%arg0: i32) -> (i32, i32) {
    %c0_i32 = arith.constant 0 : i32
    %c0_i32_0 = arith.constant 0 : i32
    %c0_i32_1 = arith.constant 0 : i32
    return %c0_i32, %c0_i32_0 : i32, i32
  }
  func.func @transform_2(%arg0: i32) -> (i32, i32) {
    %c0_i32 = arith.constant 0 : i32
    %c0_i32_0 = arith.constant 0 : i32
    %c0_i32_1 = arith.constant 0 : i32
    return %c0_i32, %c0_i32_0 : i32, i32
  }
  func.func @transform_3(%arg0: i32) -> (i32, i32) {
    %c0_i32 = arith.constant 0 : i32
    %c0_i32_0 = arith.constant 0 : i32
    return %c0_i32, %arg0 : i32, i32
  }
  func.func @transform_4(%arg0: i32) -> (i32, i32) {
    %c0_i32 = arith.constant 0 : i32
    %c0_i32_0 = arith.constant 0 : i32
    %c0_i32_1 = arith.constant 0 : i32
    return %c0_i32, %c0_i32_0 : i32, i32
  }
  func.func @transform_5(%arg0: i32) -> (i32, i32) {
    %c0_i32 = arith.constant 0 : i32
    %c0_i32_0 = arith.constant 0 : i32
    %c0_i32_1 = arith.constant 0 : i32
    return %c0_i32, %c0_i32_0 : i32, i32
  }
  func.func @transform_6(%arg0: i32) -> (i32, i32) {
    %c0_i32 = arith.constant 0 : i32
    %c0_i32_0 = arith.constant 0 : i32
    return %c0_i32, %arg0 : i32, i32
  }
  func.func @transform_7(%arg0: i32) -> (i32, i32) {
    %c0_i32 = arith.constant 0 : i32
    %c0_i32_0 = arith.constant 0 : i32
    %c0_i32_1 = arith.constant 0 : i32
    return %c0_i32, %c0_i32_0 : i32, i32
  }
  func.func @transform_8(%arg0: i32) -> (i32, i32) {
    %c0_i32 = arith.constant 0 : i32
    %c0_i32_0 = arith.constant 0 : i32
    %c0_i32_1 = arith.constant 0 : i32
    return %c0_i32, %c0_i32_0 : i32, i32
  }
  func.func @transform_9(%arg0: i32) -> (i32, i32) {
    %c0_i32 = arith.constant 0 : i32
    %c0_i32_0 = arith.constant 0 : i32
    return %c0_i32, %arg0 : i32, i32
  }
}

</mosaic_0001>

<llo_original>
// kernel: tpu_custom_call.1
$region0: #{tpu_custom_call.1}
  #allocation0 [shape = 'u32[]', space=smem, size = 0x4, offset = 0x4, fixed_abs, tag = 'smem constant byte address 0x4 - core index']
  #allocation1 [shape = 'u32[144,128]{1,0:T(1,128)}', space=vmem, size = 0x12000, scoped, tag = 'internal scratch']
  %s0 = inlined_call_operand.vmem [shape: f32[8,128], index: 0, kind: input, shape index: {}]
  %s1 = inlined_call_operand.vmem [shape: f32[50,8], index: 1, kind: input, shape index: {}]
  %s2 = inlined_call_operand.vmem [shape: f32[50,1], index: 2, kind: input, shape index: {}]
  %s3 = inlined_call_operand.vmem [shape: f32[50,128], index: 3, kind: input, shape index: {}]
  %s4 = inlined_call_operand.vmem [shape: f32[20,50], index: 4, kind: input, shape index: {}]
  %s5 = inlined_call_operand.vmem [shape: f32[20,1], index: 5, kind: input, shape index: {}]
  %s6 = inlined_call_operand.vmem [shape: f32[20,128], index: 6, kind: input, shape index: {}]
  %s7 = inlined_call_operand.vmem [shape: f32[2,20], index: 7, kind: input, shape index: {}]
  %s8 = inlined_call_operand.vmem [shape: f32[2,1], index: 8, kind: input, shape index: {}]
  %s9 = inlined_call_operand.hbm [shape: f32[2,128], index: 9, kind: output, shape index: {}]
  %s10 = sld [smem:[#allocation0]]
  $region46: #{tpu_custom_call.1} parent=0
    _
  %s12 = ssub.s32 1, %s10
  %s13 = scalar_select 0, %s12, %s10
  $region1: #{tpu_custom_call.1} parent=0
    #allocation2 [shape = 'u8[1024]{0}', space=vmem, size = 0x400, scoped, tag = 'output window, operand 0, single buffered']
    #allocation3 [shape = 's32[1]{0}', space=sflag, size = 0x4, scoped, tag = 'scoped memory for tpu_custom_call.1']
    %14 = vsyncpa [#allocation3], 0
    // Predicated region
    $region2: #{tpu_custom_call.1} parent=1 // pred_check
      _
    $region3: #{tpu_custom_call.1} parent=1 // pred_check_branch
      %16 = sbr.rel (0) target = $region5
    $region4: #{tpu_custom_call.1} parent=1 // pred_region
      _
    $region5: #{tpu_custom_call.1} parent=1 // pred_fallthru
      _
    // Predicated region
    $region6: #{tpu_custom_call.1} parent=1 // pred_check
      _
    $region7: #{tpu_custom_call.1} parent=1 // pred_check_branch
      %18 = sbr.rel (0) target = $region9
    $region8: #{tpu_custom_call.1} parent=1 // pred_region
      _
    $region9: #{tpu_custom_call.1} parent=1 // pred_fallthru
      _
    // Predicated region
    $region10: #{tpu_custom_call.1} parent=1 // pred_check
      _
    $region11: #{tpu_custom_call.1} parent=1 // pred_check_branch
      %20 = sbr.rel (0) target = $region13
    $region12: #{tpu_custom_call.1} parent=1 // pred_region
      _
    $region13: #{tpu_custom_call.1} parent=1 // pred_fallthru
      _
    // Predicated region
    $region14: #{tpu_custom_call.1} parent=1 // pred_check
      _
    $region15: #{tpu_custom_call.1} parent=1 // pred_check_branch
      %22 = sbr.rel (0) target = $region17
    $region16: #{tpu_custom_call.1} parent=1 // pred_region
      _
    $region17: #{tpu_custom_call.1} parent=1 // pred_fallthru
      _
    // Predicated region
    $region18: #{tpu_custom_call.1} parent=1 // pred_check
      _
    $region19: #{tpu_custom_call.1} parent=1 // pred_check_branch
      %24 = sbr.rel (0) target = $region21
    $region20: #{tpu_custom_call.1} parent=1 // pred_region
      _
    $region21: #{tpu_custom_call.1} parent=1 // pred_fallthru
      _
    // Predicated region
    $region22: #{tpu_custom_call.1} parent=1 // pred_check
      _
    $region23: #{tpu_custom_call.1} parent=1 // pred_check_branch
      %26 = sbr.rel (0) target = $region25
    $region24: #{tpu_custom_call.1} parent=1 // pred_region
      _
    $region25: #{tpu_custom_call.1} parent=1 // pred_fallthru
      _
    // Predicated region
    $region26: #{tpu_custom_call.1} parent=1 // pred_check
      _
    $region27: #{tpu_custom_call.1} parent=1 // pred_check_branch
      %28 = sbr.rel (0) target = $region29
    $region28: #{tpu_custom_call.1} parent=1 // pred_region
      _
    $region29: #{tpu_custom_call.1} parent=1 // pred_fallthru
      _
    // Predicated region
    $region30: #{tpu_custom_call.1} parent=1 // pred_check
      _
    $region31: #{tpu_custom_call.1} parent=1 // pred_check_branch
      %30 = sbr.rel (0) target = $region33
    $region32: #{tpu_custom_call.1} parent=1 // pred_region
      _
    $region33: #{tpu_custom_call.1} parent=1 // pred_fallthru
      _
    // Predicated region
    $region34: #{tpu_custom_call.1} parent=1 // pred_check
      _
    $region35: #{tpu_custom_call.1} parent=1 // pred_check_branch
      %32 = sbr.rel (0) target = $region37
    $region36: #{tpu_custom_call.1} parent=1 // pred_region
      _
    $region37: #{tpu_custom_call.1} parent=1 // pred_fallthru
      _
    %v33 = vld [vmem:[%s0] sm:$0xff]
    %v34 = vld [vmem:[%s1] sm:$0xff]
    %v35 = vld [vmem:[%s1 + $0x8] sm:$0xff]
    %v36 = vld [vmem:[%s1 + $0x10] sm:$0xff]
    %v37 = vld [vmem:[%s1 + $0x18] sm:$0xff]
    %v38 = vld [vmem:[%s1 + $0x20] sm:$0xff]
    %v39 = vld [vmem:[%s1 + $0x28] sm:$0xff]
    %v40 = vld [vmem:[%s1 + $0x30] sm:$0x3]
    %v41 = vld [vmem:[%s2] sm:$0xff]
    %v42 = vld [vmem:[%s2 + $0x8] sm:$0xff]
    %v43 = vld [vmem:[%s2 + $0x10] sm:$0xff]
    %v44 = vld [vmem:[%s2 + $0x18] sm:$0xff]
    %v45 = vld [vmem:[%s2 + $0x20] sm:$0xff]
    %v46 = vld [vmem:[%s2 + $0x28] sm:$0xff]
    %v47 = vld [vmem:[%s2 + $0x30] sm:$0x3]
    %49 = vset.pattern.permute.xlu0 0
    %50 = vperm.xlu0 %49, %v41
    %v51 = vpop.permute.xlu0 %50
    %54 = vset.pattern.permute.xlu0 0
    %55 = vperm.xlu0 %54, %v42
    %v56 = vpop.permute.xlu0 %55
    %59 = vset.pattern.permute.xlu0 0
    %60 = vperm.xlu0 %59, %v43
    %v61 = vpop.permute.xlu0 %60
    %64 = vset.pattern.permute.xlu0 0
    %65 = vperm.xlu0 %64, %v44
    %v66 = vpop.permute.xlu0 %65
    %69 = vset.pattern.permute.xlu0 0
    %70 = vperm.xlu0 %69, %v45
    %v71 = vpop.permute.xlu0 %70
    %74 = vset.pattern.permute.xlu0 0
    %75 = vperm.xlu0 %74, %v46
    %v76 = vpop.permute.xlu0 %75
    %79 = vset.pattern.permute.xlu0 0
    %80 = vperm.xlu0 %79, %v47
    %v81 = vpop.permute.xlu0 %80
    %vm83 = vcmask 64512
    %v85 = vsel %vm83, %v34, 0
    %v88 = vsel %vm83, %v35, 0
    %v91 = vsel %vm83, %v36, 0
    %v94 = vsel %vm83, %v37, 0
    %v97 = vsel %vm83, %v38, 0
    %v100 = vsel %vm83, %v39, 0
    %v103 = vsel %vm83, %v40, 0
    %105 = vmatprep.subr.mxu0 0.0
    %106 = vmatpush1.msra.mxu0 0.0
    %107 = vmatprep.subr.mxu0 0.0
    %108 = vmatpush1.msra.mxu0 0.0
    %109 = vmatprep.subr.mxu0 0.0
    %110 = vmatpush1.msra.mxu0 0.0
    %111 = vmatprep.subr.mxu0 0.0
    %112 = vmatpush1.msra.mxu0 0.0
    %113 = vmatprep.subr.mxu0 0.0
    %114 = vmatpush1.msra.mxu0 0.0
    %115 = vmatprep.subr.mxu0 0.0
    %116 = vmatpush1.msra.mxu0 0.0
    %117 = vmatprep.subr.mxu0 0.0
    %118 = vmatpush1.msra.mxu0 0.0
    %119 = vmatprep.subr.mxu0 0.0
    %120 = vmatpush1.msra.mxu0 0.0
    %121 = vmatprep.subr.mxu0 0.0
    %122 = vmatpush1.msra.mxu0 0.0
    %123 = vmatprep.subr.mxu0 0.0
    %124 = vmatpush1.msra.mxu0 0.0
    %125 = vmatprep.subr.mxu0 0.0
    %126 = vmatpush1.msra.mxu0 0.0
    %127 = vmatprep.subr.mxu0 0.0
    %128 = vmatpush1.msra.mxu0 0.0
    %129 = vmatprep.subr.mxu0 0.0
    %130 = vmatpush1.msra.mxu0 0.0
    %131 = vmatprep.subr.mxu0 0.0
    %132 = vmatpush1.msra.mxu0 0.0
    %133 = vmatprep.subr.mxu0 0.0
    %134 = vmatpush1.msra.mxu0 0.0
    %135 = vmatprep.subr.mxu0 0.0
    %136 = vmatpush1.msra.mxu0 %v33
    %137 = vmatprep.subr.mxu0 0.0
    %138 = vmatpush2.msra.mxu0 0.0
    %139 = vmatprep.subr.mxu0 0.0
    %140 = vmatpush2.msra.mxu0 0.0
    %141 = vmatprep.subr.mxu0 0.0
    %142 = vmatpush2.msra.mxu0 0.0
    %143 = vmatprep.subr.mxu0 0.0
    %144 = vmatpush2.msra.mxu0 0.0
    %145 = vmatprep.subr.mxu0 0.0
    %146 = vmatpush2.msra.mxu0 0.0
    %147 = vmatprep.subr.mxu0 0.0
    %148 = vmatpush2.msra.mxu0 0.0
    %149 = vmatprep.subr.mxu0 0.0
    %150 = vmatpush2.msra.mxu0 0.0
    %151 = vmatprep.subr.mxu0 0.0
    %152 = vmatpush2.msra.mxu0 0.0
    %153 = vmatprep.subr.mxu0 0.0
    %154 = vmatpush2.msra.mxu0 0.0
    %155 = vmatprep.subr.mxu0 0.0
    %156 = vmatpush2.msra.mxu0 0.0
    %157 = vmatprep.subr.mxu0 0.0
    %158 = vmatpush2.msra.mxu0 0.0
    %159 = vmatprep.subr.mxu0 0.0
    %160 = vmatpush2.msra.mxu0 0.0
    %161 = vmatprep.subr.mxu0 0.0
    %162 = vmatpush2.msra.mxu0 0.0
    %163 = vmatprep.subr.mxu0 0.0
    %164 = vmatpush2.msra.mxu0 0.0
    %165 = vmatprep.subr.mxu0 0.0
    %166 = vmatpush2.msra.mxu0 0.0
    %167 = vmatprep.subr.mxu0 0.0
    %168 = vmatpush2.msra.mxu0 0.0
    %169 = vmatprep.mubr.f32.mxu0 0.0
    %170 = vmatmul.mubr.f32.gmra.mxu0 %v85
    %v171 = vpop.f32.mrf.mxu0
    %v172 = vadd.f32 %v51, %v171
    %v173 = vpop.f32.mrf.mxu0
    %174 = vmatprep.mubr.f32.mxu0 0.0
    %175 = vmatmul.mubr.f32.gmra.mxu0 %v88
    %v176 = vpop.f32.mrf.mxu0
    %v177 = vadd.f32 %v56, %v176
    %v178 = vpop.f32.mrf.mxu0
    %179 = vmatprep.mubr.f32.mxu0 0.0
    %180 = vmatmul.mubr.f32.gmra.mxu0 %v91
    %v181 = vpop.f32.mrf.mxu0
    %v182 = vadd.f32 %v61, %v181
    %v183 = vpop.f32.mrf.mxu0
    %184 = vmatprep.mubr.f32.mxu0 0.0
    %185 = vmatmul.mubr.f32.gmra.mxu0 %v94
    %v186 = vpop.f32.mrf.mxu0
    %v187 = vadd.f32 %v66, %v186
    %v188 = vpop.f32.mrf.mxu0
    %189 = vmatprep.mubr.f32.mxu0 0.0
    %190 = vmatmul.mubr.f32.gmra.mxu0 %v97
    %v191 = vpop.f32.mrf.mxu0
    %v192 = vadd.f32 %v71, %v191
    %v193 = vpop.f32.mrf.mxu0
    %194 = vmatprep.mubr.f32.mxu0 0.0
    %195 = vmatmul.mubr.f32.gmra.mxu0 %v100
    %v196 = vpop.f32.mrf.mxu0
    %v197 = vadd.f32 %v76, %v196
    %v198 = vpop.f32.mrf.mxu0
    %199 = vmatprep.mubr.f32.mxu0 0.0
    %200 = vmatmul.mubr.f32.gmra.mxu0 %v103
    %v201 = vpop.f32.mrf.mxu0
    %v202 = vadd.f32 %v81, %v201
    %v203 = vpop.f32.mrf.mxu0
    %204 = vdwg.mxu0
    %vm205 = vcmp.gt.f32.partialorder %v172, 20.0
    %vm206 = vcmp.gt.f32.partialorder %v177, 20.0
    %vm207 = vcmp.gt.f32.partialorder %v182, 20.0
    %vm208 = vcmp.gt.f32.partialorder %v187, 20.0
    %vm209 = vcmp.gt.f32.partialorder %v192, 20.0
    %vm210 = vcmp.gt.f32.partialorder %v197, 20.0
    %vm211 = vcmp.gt.f32.partialorder %v202, 20.0
    %v212 = vmin.f32 %v172, 20.0
    %v213 = vmin.f32 %v177, 20.0
    %v214 = vmin.f32 %v182, 20.0
    %v215 = vmin.f32 %v187, 20.0
    %v216 = vmin.f32 %v192, 20.0
    %v217 = vmin.f32 %v197, 20.0
    %v218 = vmin.f32 %v202, 20.0
    %v219 = vmul.f32 %v212, 1.442695
    %v220 = vpow.pop %v219
    %v221 = vmul.f32 %v213, 1.442695
    %v222 = vpow.pop %v221
    %v223 = vmul.f32 %v214, 1.442695
    %v224 = vpow.pop %v223
    %v225 = vmul.f32 %v215, 1.442695
    %v226 = vpow.pop %v225
    %v227 = vmul.f32 %v216, 1.442695
    %v228 = vpow.pop %v227
    %v229 = vmul.f32 %v217, 1.442695
    %v230 = vpow.pop %v229
    %v231 = vmul.f32 %v218, 1.442695
    %v232 = vpow.pop %v231
    %v233 = vadd.f32 %v220, 1.0
    %v234 = vlog2.pop %v233
    %v235 = vmul.f32 %v234, 0.6931472
    %v236 = vmul.f32 -0.5, %v220
    %v237 = vadd.f32 %v236, 1.0
    %v238 = vmul.f32 %v237, %v220
    %v239 = vand.u32 2147483647, %v220
    %vm240 = vcmp.lt.f32.partialorder %v239, 0.0004427343
    %v241 = vsel %vm240, %v238, %v235
    %v242 = vadd.f32 %v222, 1.0
    %v243 = vlog2.pop %v242
    %v244 = vmul.f32 %v243, 0.6931472
    %v245 = vmul.f32 -0.5, %v222
    %v246 = vadd.f32 %v245, 1.0
    %v247 = vmul.f32 %v246, %v222
    %v248 = vand.u32 2147483647, %v222
    %vm249 = vcmp.lt.f32.partialorder %v248, 0.0004427343
    %v250 = vsel %vm249, %v247, %v244
    %v251 = vadd.f32 %v224, 1.0
    %v252 = vlog2.pop %v251
    %v253 = vmul.f32 %v252, 0.6931472
    %v254 = vmul.f32 -0.5, %v224
    %v255 = vadd.f32 %v254, 1.0
    %v256 = vmul.f32 %v255, %v224
    %v257 = vand.u32 2147483647, %v224
    %vm258 = vcmp.lt.f32.partialorder %v257, 0.0004427343
    %v259 = vsel %vm258, %v256, %v253
    %v260 = vadd.f32 %v226, 1.0
    %v261 = vlog2.pop %v260
    %v262 = vmul.f32 %v261, 0.6931472
    %v263 = vmul.f32 -0.5, %v226
    %v264 = vadd.f32 %v263, 1.0
    %v265 = vmul.f32 %v264, %v226
    %v266 = vand.u32 2147483647, %v226
    %vm267 = vcmp.lt.f32.partialorder %v266, 0.0004427343
    %v268 = vsel %vm267, %v265, %v262
    %v269 = vadd.f32 %v228, 1.0
    %v270 = vlog2.pop %v269
    %v271 = vmul.f32 %v270, 0.6931472
    %v272 = vmul.f32 -0.5, %v228
    %v273 = vadd.f32 %v272, 1.0
    %v274 = vmul.f32 %v273, %v228
    %v275 = vand.u32 2147483647, %v228
    %vm276 = vcmp.lt.f32.partialorder %v275, 0.0004427343
    %v277 = vsel %vm276, %v274, %v271
    %v278 = vadd.f32 %v230, 1.0
    %v279 = vlog2.pop %v278
    %v280 = vmul.f32 %v279, 0.6931472
    %v281 = vmul.f32 -0.5, %v230
    %v282 = vadd.f32 %v281, 1.0
    %v283 = vmul.f32 %v282, %v230
    %v284 = vand.u32 2147483647, %v230
    %vm285 = vcmp.lt.f32.partialorder %v284, 0.0004427343
    %v286 = vsel %vm285, %v283, %v280
    %v287 = vadd.f32 %v232, 1.0
    %v288 = vlog2.pop %v287
    %v289 = vmul.f32 %v288, 0.6931472
    %v290 = vmul.f32 -0.5, %v232
    %v291 = vadd.f32 %v290, 1.0
    %v292 = vmul.f32 %v291, %v232
    %v293 = vand.u32 2147483647, %v232
    %vm294 = vcmp.lt.f32.partialorder %v293, 0.0004427343
    %v295 = vsel %vm294, %v292, %v289
    %v296 = vsel %vm205, %v172, %v241
    %v297 = vsel %vm206, %v177, %v250
    %v298 = vsel %vm207, %v182, %v259
    %v299 = vsel %vm208, %v187, %v268
    %v300 = vsel %vm209, %v192, %v277
    %v301 = vsel %vm210, %v197, %v286
    %v302 = vsel %vm211, %v202, %v295
    %v303 = vld [vmem:[%s3] sm:$0xff]
    %v304 = vld [vmem:[%s3 + $0x8] sm:$0xff]
    %v305 = vld [vmem:[%s3 + $0x10] sm:$0xff]
    %v306 = vld [vmem:[%s3 + $0x18] sm:$0xff]
    %v307 = vld [vmem:[%s3 + $0x20] sm:$0xff]
    %v308 = vld [vmem:[%s3 + $0x28] sm:$0xff]
    %v309 = vld [vmem:[%s3 + $0x30] sm:$0x3]
    %v310 = vmul.f32 %v296, %v303
    %v311 = vmul.f32 %v297, %v304
    %v312 = vmul.f32 %v298, %v305
    %v313 = vmul.f32 %v299, %v306
    %v314 = vmul.f32 %v300, %v307
    %v315 = vmul.f32 %v301, %v308
    %v316 = vmul.f32 %v302, %v309
    %v317 = vld [vmem:[%s4] sm:$0xff]
    %v318 = vld [vmem:[%s4 + $0x8] sm:$0xff]
    %v319 = vld [vmem:[%s4 + $0x10] sm:$0xf]
    %v320 = vld [vmem:[%s5] sm:$0xff]
    %v321 = vld [vmem:[%s5 + $0x8] sm:$0xff]
    %v322 = vld [vmem:[%s5 + $0x10] sm:$0xf]
    %324 = vset.pattern.permute.xlu0 0
    %325 = vperm.xlu0 %324, %v320
    %v326 = vpop.permute.xlu0 %325
    %329 = vset.pattern.permute.xlu0 0
    %330 = vperm.xlu0 %329, %v321
    %v331 = vpop.permute.xlu0 %330
    %334 = vset.pattern.permute.xlu0 0
    %335 = vperm.xlu0 %334, %v322
    %v336 = vpop.permute.xlu0 %335
    %vm338 = vcmask 408576
    %v340 = vsel %vm338, %v317, 0
    %v343 = vsel %vm338, %v318, 0
    %v346 = vsel %vm338, %v319, 0
    %vm348 = vcmask 1041408
    %v350 = vsel %vm348, %v316, 0
    %352 = vmatprep.subr.mxu0 0.0
    %353 = vmatpush1.msra.mxu0 0.0
    %354 = vmatprep.subr.mxu0 0.0
    %355 = vmatpush1.msra.mxu0 0.0
    %356 = vmatprep.subr.mxu0 0.0
    %357 = vmatpush1.msra.mxu0 0.0
    %358 = vmatprep.subr.mxu0 0.0
    %359 = vmatpush1.msra.mxu0 0.0
    %360 = vmatprep.subr.mxu0 0.0
    %361 = vmatpush1.msra.mxu0 0.0
    %362 = vmatprep.subr.mxu0 0.0
    %363 = vmatpush1.msra.mxu0 0.0
    %364 = vmatprep.subr.mxu0 0.0
    %365 = vmatpush1.msra.mxu0 0.0
    %366 = vmatprep.subr.mxu0 0.0
    %367 = vmatpush1.msra.mxu0 0.0
    %368 = vmatprep.subr.mxu0 0.0
    %369 = vmatpush1.msra.mxu0 0.0
    %370 = vmatprep.subr.mxu0 0.0
    %371 = vmatpush1.msra.mxu0 %v350
    %372 = vmatprep.subr.mxu0 0.0
    %373 = vmatpush1.msra.mxu0 %v315
    %374 = vmatprep.subr.mxu0 0.0
    %375 = vmatpush1.msra.mxu0 %v314
    %376 = vmatprep.subr.mxu0 0.0
    %377 = vmatpush1.msra.mxu0 %v313
    %378 = vmatprep.subr.mxu0 0.0
    %379 = vmatpush1.msra.mxu0 %v312
    %380 = vmatprep.subr.mxu0 0.0
    %381 = vmatpush1.msra.mxu0 %v311
    %382 = vmatprep.subr.mxu0 0.0
    %383 = vmatpush1.msra.mxu0 %v310
    %384 = vmatprep.subr.mxu0 0.0
    %385 = vmatpush2.msra.mxu0 0.0
    %386 = vmatprep.subr.mxu0 0.0
    %387 = vmatpush2.msra.mxu0 0.0
    %388 = vmatprep.subr.mxu0 0.0
    %389 = vmatpush2.msra.mxu0 0.0
    %390 = vmatprep.subr.mxu0 0.0
    %391 = vmatpush2.msra.mxu0 0.0
    %392 = vmatprep.subr.mxu0 0.0
    %393 = vmatpush2.msra.mxu0 0.0
    %394 = vmatprep.subr.mxu0 0.0
    %395 = vmatpush2.msra.mxu0 0.0
    %396 = vmatprep.subr.mxu0 0.0
    %397 = vmatpush2.msra.mxu0 0.0
    %398 = vmatprep.subr.mxu0 0.0
    %399 = vmatpush2.msra.mxu0 0.0
    %400 = vmatprep.subr.mxu0 0.0
    %401 = vmatpush2.msra.mxu0 0.0
    %402 = vmatprep.subr.mxu0 0.0
    %403 = vmatpush2.msra.mxu0 0.0
    %404 = vmatprep.subr.mxu0 0.0
    %405 = vmatpush2.msra.mxu0 0.0
    %406 = vmatprep.subr.mxu0 0.0
    %407 = vmatpush2.msra.mxu0 0.0
    %408 = vmatprep.subr.mxu0 0.0
    %409 = vmatpush2.msra.mxu0 0.0
    %410 = vmatprep.subr.mxu0 0.0
    %411 = vmatpush2.msra.mxu0 0.0
    %412 = vmatprep.subr.mxu0 0.0
    %413 = vmatpush2.msra.mxu0 0.0
    %414 = vmatprep.subr.mxu0 0.0
    %415 = vmatpush2.msra.mxu0 0.0
    %416 = vmatprep.mubr.f32.mxu0 0.0
    %417 = vmatmul.mubr.f32.gmra.mxu0 %v340
    %v418 = vpop.f32.mrf.mxu0
    %v419 = vadd.f32 %v326, %v418
    %v420 = vpop.f32.mrf.mxu0
    %421 = vmatprep.mubr.f32.mxu0 0.0
    %422 = vmatmul.mubr.f32.gmra.mxu0 %v343
    %v423 = vpop.f32.mrf.mxu0
    %v424 = vadd.f32 %v331, %v423
    %v425 = vpop.f32.mrf.mxu0
    %426 = vmatprep.mubr.f32.mxu0 0.0
    %427 = vmatmul.mubr.f32.gmra.mxu0 %v346
    %v428 = vpop.f32.mrf.mxu0
    %v429 = vadd.f32 %v336, %v428
    %v430 = vpop.f32.mrf.mxu0
    %431 = vdwg.mxu0
    %vm432 = vcmp.gt.f32.partialorder %v419, 20.0
    %vm433 = vcmp.gt.f32.partialorder %v424, 20.0
    %vm434 = vcmp.gt.f32.partialorder %v429, 20.0
    %v435 = vmin.f32 %v419, 20.0
    %v436 = vmin.f32 %v424, 20.0
    %v437 = vmin.f32 %v429, 20.0
    %v438 = vmul.f32 %v435, 1.442695
    %v439 = vpow.pop %v438
    %v440 = vmul.f32 %v436, 1.442695
    %v441 = vpow.pop %v440
    %v442 = vmul.f32 %v437, 1.442695
    %v443 = vpow.pop %v442
    %v444 = vadd.f32 %v439, 1.0
    %v445 = vlog2.pop %v444
    %v446 = vmul.f32 %v445, 0.6931472
    %v447 = vmul.f32 -0.5, %v439
    %v448 = vadd.f32 %v447, 1.0
    %v449 = vmul.f32 %v448, %v439
    %v450 = vand.u32 2147483647, %v439
    %vm451 = vcmp.lt.f32.partialorder %v450, 0.0004427343
    %v452 = vsel %vm451, %v449, %v446
    %v453 = vadd.f32 %v441, 1.0
    %v454 = vlog2.pop %v453
    %v455 = vmul.f32 %v454, 0.6931472
    %v456 = vmul.f32 -0.5, %v441
    %v457 = vadd.f32 %v456, 1.0
    %v458 = vmul.f32 %v457, %v441
    %v459 = vand.u32 2147483647, %v441
    %vm460 = vcmp.lt.f32.partialorder %v459, 0.0004427343
    %v461 = vsel %vm460, %v458, %v455
    %v462 = vadd.f32 %v443, 1.0
    %v463 = vlog2.pop %v462
    %v464 = vmul.f32 %v463, 0.6931472
    %v465 = vmul.f32 -0.5, %v443
    %v466 = vadd.f32 %v465, 1.0
    %v467 = vmul.f32 %v466, %v443
    %v468 = vand.u32 2147483647, %v443
    %vm469 = vcmp.lt.f32.partialorder %v468, 0.0004427343
    %v470 = vsel %vm469, %v467, %v464
    %v471 = vsel %vm432, %v419, %v452
    %v472 = vsel %vm433, %v424, %v461
    %v473 = vsel %vm434, %v429, %v470
    %v474 = vld [vmem:[%s6] sm:$0xff]
    %v475 = vld [vmem:[%s6 + $0x8] sm:$0xff]
    %v476 = vld [vmem:[%s6 + $0x10] sm:$0xf]
    %v477 = vmul.f32 %v471, %v474
    %v478 = vmul.f32 %v472, %v475
    %v479 = vmul.f32 %v473, %v476
    %v480 = vld [vmem:[%s7] sm:$0x3]
    %v481 = vld [vmem:[%s8] sm:$0x3]
    %483 = vset.pattern.permute.xlu0 0
    %484 = vperm.xlu0 %483, %v481
    %v485 = vpop.permute.xlu0 %484
    %vm487 = vcmask 162816
    %v489 = vsel %vm487, %v480, 0
    %vm491 = vcmask 1043456
    %v493 = vsel %vm491, %v479, 0
    %495 = vmatprep.subr.mxu0 0.0
    %496 = vmatpush1.msra.mxu0 0.0
    %497 = vmatprep.subr.mxu0 0.0
    %498 = vmatpush1.msra.mxu0 0.0
    %499 = vmatprep.subr.mxu0 0.0
    %500 = vmatpush1.msra.mxu0 0.0
    %501 = vmatprep.subr.mxu0 0.0
    %502 = vmatpush1.msra.mxu0 0.0
    %503 = vmatprep.subr.mxu0 0.0
    %504 = vmatpush1.msra.mxu0 0.0
    %505 = vmatprep.subr.mxu0 0.0
    %506 = vmatpush1.msra.mxu0 0.0
    %507 = vmatprep.subr.mxu0 0.0
    %508 = vmatpush1.msra.mxu0 0.0
    %509 = vmatprep.subr.mxu0 0.0
    %510 = vmatpush1.msra.mxu0 0.0
    %511 = vmatprep.subr.mxu0 0.0
    %512 = vmatpush1.msra.mxu0 0.0
    %513 = vmatprep.subr.mxu0 0.0
    %514 = vmatpush1.msra.mxu0 0.0
    %515 = vmatprep.subr.mxu0 0.0
    %516 = vmatpush1.msra.mxu0 0.0
    %517 = vmatprep.subr.mxu0 0.0
    %518 = vmatpush1.msra.mxu0 0.0
    %519 = vmatprep.subr.mxu0 0.0
    %520 = vmatpush1.msra.mxu0 0.0
    %521 = vmatprep.subr.mxu0 0.0
    %522 = vmatpush1.msra.mxu0 %v493
    %523 = vmatprep.subr.mxu0 0.0
    %524 = vmatpush1.msra.mxu0 %v478
    %525 = vmatprep.subr.mxu0 0.0
    %526 = vmatpush1.msra.mxu0 %v477
    %527 = vmatprep.subr.mxu0 0.0
    %528 = vmatpush2.msra.mxu0 0.0
    %529 = vmatprep.subr.mxu0 0.0
    %530 = vmatpush2.msra.mxu0 0.0
    %531 = vmatprep.subr.mxu0 0.0
    %532 = vmatpush2.msra.mxu0 0.0
    %533 = vmatprep.subr.mxu0 0.0
    %534 = vmatpush2.msra.mxu0 0.0
    %535 = vmatprep.subr.mxu0 0.0
    %536 = vmatpush2.msra.mxu0 0.0
    %537 = vmatprep.subr.mxu0 0.0
    %538 = vmatpush2.msra.mxu0 0.0
    %539 = vmatprep.subr.mxu0 0.0
    %540 = vmatpush2.msra.mxu0 0.0
    %541 = vmatprep.subr.mxu0 0.0
    %542 = vmatpush2.msra.mxu0 0.0
    %543 = vmatprep.subr.mxu0 0.0
    %544 = vmatpush2.msra.mxu0 0.0
    %545 = vmatprep.subr.mxu0 0.0
    %546 = vmatpush2.msra.mxu0 0.0
    %547 = vmatprep.subr.mxu0 0.0
    %548 = vmatpush2.msra.mxu0 0.0
    %549 = vmatprep.subr.mxu0 0.0
    %550 = vmatpush2.msra.mxu0 0.0
    %551 = vmatprep.subr.mxu0 0.0
    %552 = vmatpush2.msra.mxu0 0.0
    %553 = vmatprep.subr.mxu0 0.0
    %554 = vmatpush2.msra.mxu0 0.0
    %555 = vmatprep.subr.mxu0 0.0
    %556 = vmatpush2.msra.mxu0 0.0
    %557 = vmatprep.subr.mxu0 0.0
    %558 = vmatpush2.msra.mxu0 0.0
    %559 = vmatprep.mubr.f32.mxu0 0.0
    %560 = vmatmul.mubr.f32.gmra.mxu0 %v489
    %v561 = vpop.f32.mrf.mxu0
    %v562 = vadd.f32 %v485, %v561
    %v563 = vpop.f32.mrf.mxu0
    %564 = vdwg.mxu0
    %v565 = vlaneseq
    %v566 = vshrl.u32 %v565, 7
    %vm567 = vcmp.gt.f32.partialorder %v562, 20.0
    %v568 = vmin.f32 %v562, 20.0
    %v569 = vmul.f32 %v568, 1.442695
    %v570 = vpow.pop %v569
    %v571 = vadd.f32 %v570, 1.0
    %v572 = vlog2.pop %v571
    %v573 = vmul.f32 %v572, 0.6931472
    %v574 = vmul.f32 -0.5, %v570
    %v575 = vadd.f32 %v574, 1.0
    %v576 = vmul.f32 %v575, %v570
    %v577 = vand.u32 2147483647, %v570
    %vm578 = vcmp.lt.f32.partialorder %v577, 0.0004427343
    %v579 = vsel %vm578, %v576, %v573
    %v580 = vsel %vm567, %v562, %v579
    %v581 = vadd.f32 %v580, 1e-06
    %vm582 = vcmp.eq.s32.totalorder %v566, 0
    %v583 = vsel %vm582, %v562, %v581
    %584 = vst [vmem:[#allocation2] sm:$0x3] %v583
    // Predicated region
    $region38: #{tpu_custom_call.1} parent=1 // pred_check
      _
    $region39: #{tpu_custom_call.1} parent=1 // pred_check_branch
      %586 = sbr.rel (0) target = $region41
    $region40: #{tpu_custom_call.1} parent=1 // pred_region
      %s588 = ssub.s32 32, 32
      %589 = vsyncadd [#allocation3], %s588
      %s591 = sshll.u32 [#allocation2], 4
      %s592 = int_to_ptr.vmem [resolvable:$true] %s591
      %594 = dma.vmem_to_hbm [thread:$0]  %s592, 32, %s9, [#allocation3]
    $region41: #{tpu_custom_call.1} parent=1 // pred_fallthru
      _
    // Predicated region
    $region42: #{tpu_custom_call.1} parent=1 // pred_check
      _
    $region43: #{tpu_custom_call.1} parent=1 // pred_check_branch
      %596 = sbr.rel (0) target = $region45
    $region44: #{tpu_custom_call.1} parent=1 // pred_region
      %597 = dma.done [#allocation3], 32
    $region45: #{tpu_custom_call.1} parent=1 // pred_fallthru
      _
    %598 = vsyncpa [#allocation3], 1

</llo_original>
